<compile_context>
chip_gen: v5e
topology: v5e:2x2
jax: 0.10.0
libtpu: 0.0.40
codegen_flags: <defaults>
</compile_context>

<pallas_src>
import jax
import jax.numpy as jnp
from jax.experimental import pallas as pl
from jax.experimental.pallas import tpu as pltpu


def _jacobian_blocks_kernel(x_ref, w1_ref, w3t_ref, b1_ref, out_ref):
    # channels-first, pixels-on-lanes layout (lane-dense):
    #   x_ref   : (C_in,         tile_hw)   pixels on the lane axis
    #   w1_ref  : (K,            C_in)      first 1x1-conv weight
    #   w3t_ref : (C_out*C_in,   K)         w3t[o*C_in + i, k] = w2[o,k] * w1[k,i]
    #   b1_ref  : (K,            1)         first bias (lane-broadcast)
    #   out_ref : (C_out*C_in,   tile_hw)   out[o*C_in + i, p] = dy_o/dx_i at pixel p
    x = x_ref[...]
    z1 = jnp.dot(w1_ref[...], x, preferred_element_type=jnp.float32) + b1_ref[...]
    m = (z1 > 0.0).astype(jnp.float32)           # relu'(z1); relu'(0) == 0 as in torch
    out_ref[...] = jnp.dot(w3t_ref[...], m, preferred_element_type=jnp.float32)


def _choose_tile(hw, n, c_in, c_out, max_tile=32768):
    """Pick the pixel (lane) tile size and the padded pixel count.

    * tile is a multiple of 128 (lane-dense, unmasked stores).
    * double-buffered in+out footprint kept under ~12 MiB so it fits the v5e
      16 MiB scoped-VMEM default and v7x's smaller physical VMEM untouched.
    * hw is padded up to a multiple of the tile (no divisor scan / ValueError).
    * when the natural grid would be a single step, split the pixel axis in
      two so v7x megacore gets >=2 parallel grid steps.
    """
    bytes_per_px = 2 * (c_in + c_out * c_in) * 4           # double-buffered x + out
    vmem_cap_px = max(128, ((12 * 1024 * 1024) // bytes_per_px) // 128 * 128)
    max_tile = min((max_tile // 128) * 128, vmem_cap_px)

    hw128 = ((hw + 127) // 128) * 128                       # round up to lanes
    num_tiles = max(1, -(-hw128 // max_tile))                # cdiv
    if n == 1 and num_tiles == 1 and hw128 >= 256:
        num_tiles = 2                                        # >=2 steps for v7x megacore
    tile = ((-(-hw128 // num_tiles) + 127) // 128) * 128     # cdiv, rounded to 128
    hw_pad = num_tiles * tile
    return tile, hw_pad


def _per_pixel_jacobian(x_r, w1, b1, w2):
    # x_r: (N, C_in, HW) channels-first, pixels contiguous (free reshape of NCHW).
    N, C_in, HW = x_r.shape
    K = w1.shape[0]
    C_out = w2.shape[0]

    tile_hw, hw_pad = _choose_tile(HW, N, C_in, C_out)
    if hw_pad != HW:
        # Zero-pad the pixel axis; padded columns produce garbage Jacobian
        # values that are sliced off below.
        x_r = jnp.pad(x_r, ((0, 0), (0, 0), (0, hw_pad - HW)))

    # Fold the two 1x1-conv weights into a single (C_out*C_in, K) Jacobian weight.
    w3t = jnp.einsum("ok,ki->oik", w2, w1).reshape(C_out * C_in, K)

    # Portable explicit scoped-VMEM budget: 2x the double-buffered footprint,
    # floored at 16 MiB (every generation's default or below) and capped at
    # 32 MiB (v6e/v7x scoped default).
    vmem_needed = (2 * (C_in + C_out * C_in) * tile_hw
                   + 2 * (K * C_in + C_out * C_in * K + K)) * 4
    vmem_limit = int(min(32 * 1024 * 1024,
                         max(2 * vmem_needed, 16 * 1024 * 1024)))

    grid = (N, hw_pad // tile_hw)
    j_flat = pl.pallas_call(
        _jacobian_blocks_kernel,
        out_shape=jax.ShapeDtypeStruct((N, C_out * C_in, hw_pad), jnp.float32),
        grid_spec=pl.GridSpec(
            grid=grid,
            in_specs=[
                pl.BlockSpec((None, C_in, tile_hw), lambda n, p: (n, 0, p)),
                pl.BlockSpec((K, C_in), lambda n, p: (0, 0)),
                pl.BlockSpec((C_out * C_in, K), lambda n, p: (0, 0)),
                pl.BlockSpec((K, 1), lambda n, p: (0, 0)),
            ],
            out_specs=pl.BlockSpec((None, C_out * C_in, tile_hw),
                                   lambda n, p: (n, 0, p)),
        ),
        compiler_params=pltpu.CompilerParams(
            dimension_semantics=("parallel", "parallel"),
            vmem_limit_bytes=vmem_limit),
    )(x_r, w1, w3t, b1.reshape(K, 1))

    return j_flat[:, :, :HW]                                  # (N, C_out*C_in, HW)


def jacobin_net_forward(x, w1, b1, w2, b2, create_graph=False, strict=False):
    """JAX/Pallas equivalent of jacobinNet.forward(x, create_graph, strict).

    Returns J with torch convention: shape = dnn(x).shape + x.shape
    = (N, C_out, H, W, N, C_in, H, W).
    create_graph / strict only affect autograd graph construction in torch, not
    the returned value, so they are accepted and ignored here.
    """
    del b2  # additive output bias does not affect the Jacobian value
    N, C_in, H, W = x.shape
    C_out = w2.shape[0]
    HW = H * W

    # NCHW is already channels-first with contiguous pixels per batch element:
    # a pure reshape, no HBM transpose pass.
    x_r = x.reshape(N, C_in, HW)

    j_flat = _per_pixel_jacobian(x_r, w1, b1, w2)             # (N, C_out*C_in, HW)
    j_blocks = jnp.transpose(
        j_flat.reshape(N, C_out, C_in, H, W), (0, 3, 4, 1, 2))  # (N, H, W, o, i)

    # Scatter the per-pixel blocks onto the (batch, spatial) diagonal of the
    # dense Jacobian (zeros init + indexed diagonal write; no dense identity
    # einsum). The dense (N*H*W)^2-sized output is mandated by the torch
    # autograd.functional.jacobian convention.
    J = jnp.zeros((N, C_out, H, W, N, C_in, H, W), j_blocks.dtype)
    b_idx = jnp.arange(N)[:, None, None]
    h_idx = jnp.arange(H)[None, :, None]
    w_idx = jnp.arange(W)[None, None, :]
    J = J.at[b_idx, :, h_idx, w_idx, b_idx, :, h_idx, w_idx].set(j_blocks)
    return J


if __name__ == "__main__":
    key = jax.random.PRNGKey(0)
    kx, k1, k2, k3, k4 = jax.random.split(key, 5)

    N, C, H, W, K = 2, 4, 16, 16, 8

    x = jax.random.normal(kx, (N, C, H, W), jnp.float32)
    # deterministic synthetic parameters for the wrapped dnn (1x1 conv denoiser)
    w1 = 0.3 * jax.random.normal(k1, (K, C), jnp.float32)   # Conv1x1 C->K weight
    b1 = 0.1 * jax.random.normal(k2, (K,), jnp.float32)
    w2 = 0.3 * jax.random.normal(k3, (C, K), jnp.float32)   # Conv1x1 K->C weight
    b2 = 0.1 * jax.random.normal(k4, (C,), jnp.float32)

    J = jacobin_net_forward(x, w1, b1, w2, b2, create_graph=False, strict=False)
    J = jax.block_until_ready(J)

    # Reference: exact Jacobian of the same dnn via pure-JAX forward-mode AD.
    def dnn_ref(xx):
        z = jnp.einsum("kc,nchw->nkhw", w1, xx) + b1[None, :, None, None]
        h = jax.nn.relu(z)
        return jnp.einsum("ck,nkhw->nchw", w2, h) + b2[None, :, None, None]

    J_ref = jax.jacfwd(dnn_ref)(x)

    assert J.shape == (N, C, H, W, N, C, H, W), J.shape
    assert jnp.allclose(J, J_ref, atol=1e-5, rtol=1e-5), "Jacobian mismatch"

    # TODO(synk): autograd.functional.jacobian of an *arbitrary* black-box dnn
    # has no direct Pallas equivalent; this implementation fixes a concrete
    # PnP/RED-style 1x1-conv denoiser and computes its Jacobian analytically.
    print("KERNEL_OK")
</pallas_src>

<mosaic_0001>
module attributes {stable_mosaic.version = 11 : i64} {
  func.func @_jacobian_blocks_kernel(%arg0: i32, %arg1: i32, %arg2: memref<1x4x256xf32, #tpu.memory_space<vmem>>, %arg3: memref<8x4xf32, #tpu.memory_space<vmem>>, %arg4: memref<16x8xf32, #tpu.memory_space<vmem>>, %arg5: memref<8x1xf32, #tpu.memory_space<vmem>>, %arg6: memref<1x16x256xf32, #tpu.memory_space<vmem>>) attributes {dimension_semantics = [#tpu.dimension_semantics<parallel>, #tpu.dimension_semantics<parallel>], iteration_bounds = array<i64: 2, 1>, scalar_prefetch = 0 : i64, scratch_operands = 0 : i64, tpu.core_type = #tpu.core_type<tc>, window_params = [{transform_indices = @transform_0, window_bounds = array<i64: 1, 4, 256>}, {pipeline_mode = #tpu.pipeline_mode<synchronous>, transform_indices = @transform_1, window_bounds = array<i64: 8, 4>}, {pipeline_mode = #tpu.pipeline_mode<synchronous>, transform_indices = @transform_2, window_bounds = array<i64: 16, 8>}, {pipeline_mode = #tpu.pipeline_mode<synchronous>, transform_indices = @transform_3, window_bounds = array<i64: 8, 1>}, {transform_indices = @transform_4, window_bounds = array<i64: 1, 16, 256>}]} {
    %c0 = arith.constant 0 : index
    %c0_0 = arith.constant 0 : index
    %c0_1 = arith.constant 0 : index
    %0 = vector.load %arg2[%c0, %c0_0, %c0_1] : memref<1x4x256xf32, #tpu.memory_space<vmem>>, vector<1x4x256xf32>
    %1 = vector.shape_cast %0 : vector<1x4x256xf32> to vector<4x256xf32>
    %c0_2 = arith.constant 0 : index
    %c0_3 = arith.constant 0 : index
    %2 = vector.load %arg3[%c0_2, %c0_3] : memref<8x4xf32, #tpu.memory_space<vmem>>, vector<8x4xf32>
    %cst = arith.constant dense<0.000000e+00> : vector<8x256xf32>
    %3 = tpu.matmul %2, %1, %cst {dimension_numbers = #tpu.dot_dimension_numbers<[1], [0], [0], [1], [0, 0, 1, 1], [], []>} : vector<8x4xf32>, vector<4x256xf32>, vector<8x256xf32> -> vector<8x256xf32>
    %c0_4 = arith.constant 0 : index
    %c0_5 = arith.constant 0 : index
    %4 = vector.load %arg5[%c0_4, %c0_5] : memref<8x1xf32, #tpu.memory_space<vmem>>, vector<8x1xf32>
    %5 = vector.broadcast %4 : vector<8x1xf32> to vector<8x256xf32>
    %6 = arith.addf %3, %5 : vector<8x256xf32>
    %cst_6 = arith.constant 0.000000e+00 : f32
    %7 = vector.broadcast %cst_6 : f32 to vector<8x256xf32>
    %8 = arith.cmpf ogt, %6, %7 : vector<8x256xf32>
    %9 = arith.extui %8 : vector<8x256xi1> to vector<8x256xi32>
    %10 = arith.sitofp %9 : vector<8x256xi32> to vector<8x256xf32>
    %c0_7 = arith.constant 0 : index
    %c0_8 = arith.constant 0 : index
    %11 = vector.load %arg4[%c0_7, %c0_8] : memref<16x8xf32, #tpu.memory_space<vmem>>, vector<16x8xf32>
    %cst_9 = arith.constant dense<0.000000e+00> : vector<16x256xf32>
    %12 = tpu.matmul %11, %10, %cst_9 {dimension_numbers = #tpu.dot_dimension_numbers<[1], [0], [0], [1], [0, 0, 1, 1], [], []>} : vector<16x8xf32>, vector<8x256xf32>, vector<16x256xf32> -> vector<16x256xf32>
    %c0_10 = arith.constant 0 : index
    %c0_11 = arith.constant 0 : index
    %c0_12 = arith.constant 0 : index
    %13 = vector.load %arg6[%c0_10, %c0_11, %c0_12] : memref<1x16x256xf32, #tpu.memory_space<vmem>>, vector<1x16x256xf32>
    %14 = vector.shape_cast %13 : vector<1x16x256xf32> to vector<16x256xf32>
    %15 = vector.shape_cast %12 : vector<16x256xf32> to vector<1x16x256xf32>
    tpu.vector_store %arg6[%c0_10, %c0_11, %c0_12], %15 {strides = array<i32>} : memref<1x16x256xf32, #tpu.memory_space<vmem>>, vector<1x16x256xf32>,
    return
  }
  func.func @transform_0(%arg0: i32, %arg1: i32) -> (i32, i32, i32) {
    %c0_i32 = arith.constant 0 : i32
    %c0_i32_0 = arith.constant 0 : i32
    return %arg0, %c0_i32, %arg1 : i32, i32, i32
  }
  func.func @transform_1(%arg0: i32, %arg1: i32) -> (i32, i32) {
    %c0_i32 = arith.constant 0 : i32
    %c0_i32_0 = arith.constant 0 : i32
    %c0_i32_1 = arith.constant 0 : i32
    return %c0_i32, %c0_i32_0 : i32, i32
  }
  func.func @transform_2(%arg0: i32, %arg1: i32) -> (i32, i32) {
    %c0_i32 = arith.constant 0 : i32
    %c0_i32_0 = arith.constant 0 : i32
    %c0_i32_1 = arith.constant 0 : i32
    return %c0_i32, %c0_i32_0 : i32, i32
  }
  func.func @transform_3(%arg0: i32, %arg1: i32) -> (i32, i32) {
    %c0_i32 = arith.constant 0 : i32
    %c0_i32_0 = arith.constant 0 : i32
    %c0_i32_1 = arith.constant 0 : i32
    return %c0_i32, %c0_i32_0 : i32, i32
  }
  func.func @transform_4(%arg0: i32, %arg1: i32) -> (i32, i32, i32) {
    %c0_i32 = arith.constant 0 : i32
    %c0_i32_0 = arith.constant 0 : i32
    return %arg0, %c0_i32, %arg1 : i32, i32, i32
  }
}

</mosaic_0001>

<llo_original>
// kernel: tpu_custom_call.1
$region0: #{tpu_custom_call.1}
  #allocation0 [shape = 'u32[]', space=smem, size = 0x4, offset = 0x4, fixed_abs, tag = 'smem constant byte address 0x4 - core index']
  #allocation1 [shape = 'u32[72,128]{1,0:T(1,128)}', space=vmem, size = 0x9000, scoped, tag = 'internal scratch']
  %s0 = inlined_call_operand.vmem [shape: f32[2,4,256], index: 0, kind: input, shape index: {}]
  %s1 = inlined_call_operand.vmem [shape: f32[8,4], index: 1, kind: input, shape index: {}]
  %s2 = inlined_call_operand.vmem [shape: f32[16,8], index: 2, kind: input, shape index: {}]
  %s3 = inlined_call_operand.vmem [shape: f32[8,1], index: 3, kind: input, shape index: {}]
  %s4 = inlined_call_operand.hbm [shape: f32[2,16,256], index: 4, kind: output, shape index: {}]
  %s5 = sld [smem:[#allocation0]]
  $region49: #{tpu_custom_call.1} parent=0
    _
  %s7 = ssub.s32 1, %s5
  %s8 = scalar_select 0, %s7, %s5
  $region1: #{tpu_custom_call.1} parent=0
    #allocation2 [shape = 'u8[32768]{0}', space=vmem, size = 0x8000, scoped, tag = 'output window, operand 0']
    #allocation3 [shape = 's32[2]{0}', space=sflag, size = 0x8, scoped, tag = 'scoped memory for tpu_custom_call.1']
    %9 = vsyncpa [#allocation3], 0
    %s10 = scalar_lea.sflag [#allocation3], 1
    %11 = vsyncpa %s10, 0
    loop: start=0, step=1, limit=4
    $region2: #{tpu_custom_call.1} parent=1 // loop_pre_header
      _
    $region3: #{tpu_custom_call.1} parent=1 // loop_header
      %s13 = sphi 0, %s17
      %p14 = scmp.ge.s32.totalorder %s13, 4
      %s20 = sphi 0, %s32
      %s21 = sphi 0, %s28
      %s22 = sphi 0, %s20
      %s23 = sphi 0, %s21
      %s24 = sphi 0, %s22
      %s25 = sphi 0, %s23
      %s37 = sphi 0, %s39
      %s40 = sphi 0, %s37
      %s41 = sphi 0, %s40
      %s57 = sphi 0, %s41
      %s61 = sphi 0, %s61
      %s63 = sphi 0, %s61
      %s64 = sphi 0, %s63
      %s78 = sphi 0, %s64
      %s82 = sphi 0, %s82
      %s84 = sphi 0, %s82
      %s85 = sphi 0, %s84
      %s99 = sphi 0, %s85
      %s103 = sphi 0, %s103
      %s105 = sphi 0, %s103
      %s106 = sphi 0, %s105
      %s120 = sphi 0, %s106
      %s128 = sphi 0, %s130
      %s131 = sphi 0, %s128
      %s132 = sphi 0, %s131
      %s148 = sphi 0, %s132
    $region4: #{tpu_custom_call.1} parent=1 // loop_header_branch
      %16 = sbr.rel (%p14) target = $region8
    $region5: #{tpu_custom_call.1} parent=1 // loop_body
      %s18 = ssub.s32 %s13, 1
      %s19 = ssub.s32 %s13, 2
      %s26 = sadd.s32 1, %s21
      %p27 = scmp.ge.s32.totalorder %s26, 1
      %s28 = scalar_select %p27, 0, %s26
      %s29 = sadd.s32 1, %s20
      %s30 = scalar_select %p27, %s29, %s20
      %p31 = scmp.ge.s32.totalorder %s30, 2
      %s32 = scalar_select %p31, 0, %s30
      %s33 = ssub.s32 %s20, %s32
      %s34 = ssub.s32 %s21, %s28
      %s35 = sor.u32 %s33, %s34
      %p36 = scmp.eq.s32.totalorder %s35, 0
      %s38 = sadd.s32 %s37, 1
      %s39 = scalar_select %p36, %s37, %s38
      %p42 = pneg %p36
      %p43 = scmp.eq.s32.totalorder %s13, 1
      %p44 = por %p42, %p43
      %p45 = scmp.ne.s32.totalorder %s37, %s40
      %p46 = scmp.eq.s32.totalorder %s13, 0
      %p47 = por %p45, %p46
      %p48 = scmp.ne.s32.totalorder %s37, %s40
      %p49 = scmp.eq.s32.totalorder %s18, 1
      %p50 = por %p48, %p49
      %p51 = scmp.ne.s32.totalorder %s40, %s41
      %p52 = scmp.eq.s32.totalorder %s18, 0
      %p53 = por %p51, %p52
      %p54 = scmp.ne.s32.totalorder %s40, %s41
      %p55 = scmp.eq.s32.totalorder %s19, 1
      %p56 = por %p54, %p55
      %p58 = scmp.ne.s32.totalorder %s41, %s57
      %p59 = scmp.eq.s32.totalorder %s19, 0
      %p60 = por %p58, %p59
      %s62 = sadd.s32 %s61, 1
      %p65 = scmp.eq.s32.totalorder %s13, 1
      %p66 = scmp.ne.s32.totalorder %s61, %s63
      %p67 = scmp.eq.s32.totalorder %s13, 0
      %p68 = por %p66, %p67
      %p69 = scmp.ne.s32.totalorder %s61, %s63
      %p70 = scmp.eq.s32.totalorder %s18, 1
      %p71 = por %p69, %p70
      %p72 = scmp.ne.s32.totalorder %s63, %s64
      %p73 = scmp.eq.s32.totalorder %s18, 0
      %p74 = por %p72, %p73
      %p75 = scmp.ne.s32.totalorder %s63, %s64
      %p76 = scmp.eq.s32.totalorder %s19, 1
      %p77 = por %p75, %p76
      %p79 = scmp.ne.s32.totalorder %s64, %s78
      %p80 = scmp.eq.s32.totalorder %s19, 0
      %p81 = por %p79, %p80
      %s83 = sadd.s32 %s82, 1
      %p86 = scmp.eq.s32.totalorder %s13, 1
      %p87 = scmp.ne.s32.totalorder %s82, %s84
      %p88 = scmp.eq.s32.totalorder %s13, 0
      %p89 = por %p87, %p88
      %p90 = scmp.ne.s32.totalorder %s82, %s84
      %p91 = scmp.eq.s32.totalorder %s18, 1
      %p92 = por %p90, %p91
      %p93 = scmp.ne.s32.totalorder %s84, %s85
      %p94 = scmp.eq.s32.totalorder %s18, 0
      %p95 = por %p93, %p94
      %p96 = scmp.ne.s32.totalorder %s84, %s85
      %p97 = scmp.eq.s32.totalorder %s19, 1
      %p98 = por %p96, %p97
      %p100 = scmp.ne.s32.totalorder %s85, %s99
      %p101 = scmp.eq.s32.totalorder %s19, 0
      %p102 = por %p100, %p101
      %s104 = sadd.s32 %s103, 1
      %p107 = scmp.eq.s32.totalorder %s13, 1
      %p108 = scmp.ne.s32.totalorder %s103, %s105
      %p109 = scmp.eq.s32.totalorder %s13, 0
      %p110 = por %p108, %p109
      %p111 = scmp.ne.s32.totalorder %s103, %s105
      %p112 = scmp.eq.s32.totalorder %s18, 1
      %p113 = por %p111, %p112
      %p114 = scmp.ne.s32.totalorder %s105, %s106
      %p115 = scmp.eq.s32.totalorder %s18, 0
      %p116 = por %p114, %p115
      %p117 = scmp.ne.s32.totalorder %s105, %s106
      %p118 = scmp.eq.s32.totalorder %s19, 1
      %p119 = por %p117, %p118
      %p121 = scmp.ne.s32.totalorder %s106, %s120
      %p122 = scmp.eq.s32.totalorder %s19, 0
      %p123 = por %p121, %p122
      %s124 = ssub.s32 %s20, %s32
      %s125 = ssub.s32 %s21, %s28
      %s126 = sor.u32 %s124, %s125
      %p127 = scmp.eq.s32.totalorder %s126, 0
      %s129 = sadd.s32 %s128, 1
      %s130 = scalar_select %p127, %s128, %s129
      %p133 = pneg %p127
      %p134 = scmp.eq.s32.totalorder %s13, 1
      %p135 = por %p133, %p134
      %p136 = scmp.ne.s32.totalorder %s128, %s131
      %p137 = scmp.eq.s32.totalorder %s13, 0
      %p138 = por %p136, %p137
      %p139 = scmp.ne.s32.totalorder %s128, %s131
      %p140 = scmp.eq.s32.totalorder %s18, 1
      %p141 = por %p139, %p140
      %p142 = scmp.ne.s32.totalorder %s131, %s132
      %p143 = scmp.eq.s32.totalorder %s18, 0
      %p144 = por %p142, %p143
      %p145 = scmp.ne.s32.totalorder %s131, %s132
      %p146 = scmp.eq.s32.totalorder %s19, 1
      %p147 = por %p145, %p146
      %p149 = scmp.ne.s32.totalorder %s132, %s148
      %p150 = scmp.eq.s32.totalorder %s19, 0
      %p151 = por %p149, %p150
      %p152 = scmp.le.s32.totalorder 1, %s13
      %p153 = scmp.lt.s32.totalorder %s13, 3
      %p154 = pnand %p152, %p153
      %p155 = pneg %p154
      // Predicated region
      $region9: #{tpu_custom_call.1} parent=5 // pred_check
        _
      $region10: #{tpu_custom_call.1} parent=5 // pred_check_branch
        %157 = sbr.rel (%p154) target = $region12
      $region11: #{tpu_custom_call.1} parent=5 // pred_region
        %s158 = ssub.s32 %s13, 1
        // Predicated region
        $region13: #{tpu_custom_call.1} parent=11 // pred_check
          %p159 = pneg %p74
        $region14: #{tpu_custom_call.1} parent=11 // pred_check_branch
          %161 = sbr.rel (%p159) target = $region16
        $region15: #{tpu_custom_call.1} parent=11 // pred_region
          _
        $region16: #{tpu_custom_call.1} parent=11 // pred_fallthru
          _
        // Predicated region
        $region17: #{tpu_custom_call.1} parent=11 // pred_check
          %p162 = pneg %p95
        $region18: #{tpu_custom_call.1} parent=11 // pred_check_branch
          %164 = sbr.rel (%p162) target = $region20
        $region19: #{tpu_custom_call.1} parent=11 // pred_region
          _
        $region20: #{tpu_custom_call.1} parent=11 // pred_fallthru
          _
        // Predicated region
        $region21: #{tpu_custom_call.1} parent=11 // pred_check
          %p165 = pneg %p116
        $region22: #{tpu_custom_call.1} parent=11 // pred_check_branch
          %167 = sbr.rel (%p165) target = $region24
        $region23: #{tpu_custom_call.1} parent=11 // pred_region
          _
        $region24: #{tpu_custom_call.1} parent=11 // pred_fallthru
          _
      $region12: #{tpu_custom_call.1} parent=5 // pred_fallthru
        _
      %p168 = scmp.lt.s32.totalorder %s13, 2
      // Predicated region
      $region25: #{tpu_custom_call.1} parent=5 // pred_check
        %p169 = pneg %p168
      $region26: #{tpu_custom_call.1} parent=5 // pred_check_branch
        %171 = sbr.rel (%p169) target = $region28
      $region27: #{tpu_custom_call.1} parent=5 // pred_region
        // Predicated region
        $region29: #{tpu_custom_call.1} parent=27 // pred_check
          %p172 = pneg %p47
        $region30: #{tpu_custom_call.1} parent=27 // pred_check_branch
          %174 = sbr.rel (%p172) target = $region32
        $region31: #{tpu_custom_call.1} parent=27 // pred_region
          %s175 = smul.u32 2, %s21
          %p176 = scmp.lt.s32.totalorder %s20, 1
          %s177 = scalar_select %p176, %s20, 1
          %p178 = scmp.lt.s32.totalorder %s175, 1
          %s179 = scalar_select %p178, %s175, 1
          %s180 = smul.addr %s177, 2
          %s181 = sadd.s32 %s179, %s180
          %s182 = smul.addr %s181, 4
          %s183 = scalar_lea.vmem %s0, %s182
          %s184 = smul.u32 2, %s21
        $region32: #{tpu_custom_call.1} parent=27 // pred_fallthru
          _
      $region28: #{tpu_custom_call.1} parent=5 // pred_fallthru
        _
      %p185 = scmp.le.s32.totalorder 1, %s13
      %p186 = scmp.lt.s32.totalorder %s13, 3
      %p187 = pnand %p185, %p186
      %p188 = pneg %p187
      // Predicated region
      $region33: #{tpu_custom_call.1} parent=5 // pred_check
        _
      $region34: #{tpu_custom_call.1} parent=5 // pred_check_branch
        %190 = sbr.rel (%p187) target = $region36
      $region35: #{tpu_custom_call.1} parent=5 // pred_region
        %s191 = ssub.s32 %s13, 1
        %s192 = smul.u32 2, %s23
        %p193 = scmp.lt.s32.totalorder %s22, 1
        %s194 = scalar_select %p193, %s22, 1
        %p195 = scmp.lt.s32.totalorder %s192, 1
        %s196 = scalar_select %p195, %s192, 1
        %s197 = smul.addr %s194, 2
        %s198 = sadd.s32 %s196, %s197
        %s199 = smul.addr %s198, 4
        %s200 = scalar_lea.vmem %s0, %s199
        %p201 = pneg %p53
        %p202 = pneg %p50
        %p203 = pneg %p74
        %p204 = pneg %p71
        %p205 = pneg %p95
        %p206 = pneg %p92
        %p207 = pneg %p116
        %p208 = pneg %p113
        %p209 = pneg %p144
        %p210 = pneg %p141
        %s211 = sand.u32 %s131, 1
        %s212 = scalar_lea.sflag [#allocation3], %s211
        %s213 = sand.u32 %s131, 1
        %s214 = smul.addr %s213, 32
        %s215 = scalar_lea.vmem [#allocation2], %s214
        %s216 = smul.u32 2, %s23
        %p217 = scmp.lt.s32.totalorder %s22, 1
        %s218 = scalar_select %p217, %s22, 1
        %p219 = scmp.lt.s32.totalorder %s216, 1
        %s220 = scalar_select %p219, %s216, 1
        %s221 = smul.addr %s218, 2
        %s222 = sadd.s32 %s220, %s221
        %s223 = smul.addr %s222, 4
        %s224 = scalar_lea.vmem %s0, %s223
        %s225 = smul.u32 2, %s23
        %s226 = smul.u32 2, %s23
        %v227 = vld [vmem:[%s224] sm:$0xff]
        %v228 = vld [vmem:[%s1] sm:$0xff]
        %v229 = vld [vmem:[%s3] sm:$0xff]
        %231 = vset.pattern.permute.xlu0 0
        %232 = vperm.xlu0 %231, %v229
        %v233 = vpop.permute.xlu0 %232
        %236 = vst [vmem:[#allocation1] ss:$2 sm:$0xff] %v227
        %v237 = vld.sshfl [vmem:[#allocation1] sm:$0xff pattern:$0x75316420]
        %v238 = vld.sshfl [vmem:[#allocation1 + $0x8] sm:$0xff pattern:$0x75316420]
        %vm239 = vcmask 31744
        %v241 = vsel %vm239, %v228, 0
        %vm243 = vcmask 1043456
        %v244 = vsel %vm243, %v237, 0
        %v246 = vsel %vm243, %v238, 0
        %248 = vmatpush.msra.mxu0 0.0
        %249 = vmatpush.msra.mxu0 0.0
        %250 = vmatpush.msra.mxu0 0.0
        %251 = vmatpush.msra.mxu0 0.0
        %252 = vmatpush.msra.mxu0 0.0
        %253 = vmatpush.msra.mxu0 0.0
        %254 = vmatpush.msra.mxu0 0.0
        %255 = vmatpush.msra.mxu0 0.0
        %256 = vmatpush.msra.mxu0 0.0
        %257 = vmatpush.msra.mxu0 0.0
        %258 = vmatpush.msra.mxu0 0.0
        %259 = vmatpush.msra.mxu0 0.0
        %260 = vmatpush.msra.mxu0 0.0
        %261 = vmatpush.msra.mxu0 0.0
        %262 = vmatpush.msra.mxu0 0.0
        %263 = vmatpush.msra.mxu0 %v244
        %264 = vmatmul.f32.gmra.mxu0 %v241
        %v265 = vpop.f32.mrf.mxu0
        %v266 = vadd.f32 %v233, %v265
        %267 = vdwg.mxu0
        %268 = vmatpush.msra.mxu0 0.0
        %269 = vmatpush.msra.mxu0 0.0
        %270 = vmatpush.msra.mxu0 0.0
        %271 = vmatpush.msra.mxu0 0.0
        %272 = vmatpush.msra.mxu0 0.0
        %273 = vmatpush.msra.mxu0 0.0
        %274 = vmatpush.msra.mxu0 0.0
        %275 = vmatpush.msra.mxu0 0.0
        %276 = vmatpush.msra.mxu0 0.0
        %277 = vmatpush.msra.mxu0 0.0
        %278 = vmatpush.msra.mxu0 0.0
        %279 = vmatpush.msra.mxu0 0.0
        %280 = vmatpush.msra.mxu0 0.0
        %281 = vmatpush.msra.mxu0 0.0
        %282 = vmatpush.msra.mxu0 0.0
        %283 = vmatpush.msra.mxu0 %v246
        %284 = vmatmul.f32.gmra.mxu0 %v241
        %v285 = vpop.f32.mrf.mxu0
        %v286 = vadd.f32 %v233, %v285
        %287 = vdwg.mxu0
        %vm288 = vcmp.gt.f32.partialorder %v266, 0.0
        %vm289 = vcmp.gt.f32.partialorder %v286, 0.0
        %v290 = vsel %vm288, 1, 0
        %v291 = vsel %vm289, 1, 0
        %v292 = vcvt.s32.f32 %v290
        %v293 = vcvt.s32.f32 %v291
        %v294 = vld [vmem:[%s2] sm:$0xff]
        %v295 = vld [vmem:[%s2 + $0x8] sm:$0xff]
        %vm296 = vcmask 64512
        %v298 = vsel %vm296, %v294, 0
        %v301 = vsel %vm296, %v295, 0
        %303 = vmatpush.msra.mxu0 0.0
        %304 = vmatpush.msra.mxu0 0.0
        %305 = vmatpush.msra.mxu0 0.0
        %306 = vmatpush.msra.mxu0 0.0
        %307 = vmatpush.msra.mxu0 0.0
        %308 = vmatpush.msra.mxu0 0.0
        %309 = vmatpush.msra.mxu0 0.0
        %310 = vmatpush.msra.mxu0 0.0
        %311 = vmatpush.msra.mxu0 0.0
        %312 = vmatpush.msra.mxu0 0.0
        %313 = vmatpush.msra.mxu0 0.0
        %314 = vmatpush.msra.mxu0 0.0
        %315 = vmatpush.msra.mxu0 0.0
        %316 = vmatpush.msra.mxu0 0.0
        %317 = vmatpush.msra.mxu0 0.0
        %318 = vmatpush.msra.mxu0 %v292
        %319 = vmatmul.f32.gmra.mxu0 %v298
        %v320 = vpop.f32.mrf.mxu0
        %v321 = vadd.f32 0.0, %v320
        %322 = vmatmul.f32.gmra.mxu0 %v301
        %v323 = vpop.f32.mrf.mxu0
        %v324 = vadd.f32 0.0, %v323
        %325 = vdwg.mxu0
        %326 = vmatpush.msra.mxu0 0.0
        %327 = vmatpush.msra.mxu0 0.0
        %328 = vmatpush.msra.mxu0 0.0
        %329 = vmatpush.msra.mxu0 0.0
        %330 = vmatpush.msra.mxu0 0.0
        %331 = vmatpush.msra.mxu0 0.0
        %332 = vmatpush.msra.mxu0 0.0
        %333 = vmatpush.msra.mxu0 0.0
        %334 = vmatpush.msra.mxu0 0.0
        %335 = vmatpush.msra.mxu0 0.0
        %336 = vmatpush.msra.mxu0 0.0
        %337 = vmatpush.msra.mxu0 0.0
        %338 = vmatpush.msra.mxu0 0.0
        %339 = vmatpush.msra.mxu0 0.0
        %340 = vmatpush.msra.mxu0 0.0
        %341 = vmatpush.msra.mxu0 %v293
        %342 = vmatmul.f32.gmra.mxu0 %v298
        %v343 = vpop.f32.mrf.mxu0
        %v344 = vadd.f32 0.0, %v343
        %345 = vmatmul.f32.gmra.mxu0 %v301
        %v346 = vpop.f32.mrf.mxu0
        %v347 = vadd.f32 0.0, %v346
        %348 = vdwg.mxu0
        %349 = vst [vmem:[%s215] sm:$0xff] %v321
        %350 = vst [vmem:[%s215 + $0x8] sm:$0xff] %v344
        %351 = vst [vmem:[%s215 + $0x10] sm:$0xff] %v324
        %352 = vst [vmem:[%s215 + $0x18] sm:$0xff] %v347
        %s353 = sand.u32 %s131, 1
        %s354 = scalar_lea.sflag [#allocation3], %s353
        %s355 = sand.u32 %s131, 1
        %s356 = smul.addr %s355, 32
        %s357 = scalar_lea.vmem [#allocation2], %s356
        // Predicated region
        $region37: #{tpu_custom_call.1} parent=35 // pred_check
          %p358 = pneg %p141
        $region38: #{tpu_custom_call.1} parent=35 // pred_check_branch
          %360 = sbr.rel (%p358) target = $region40
        $region39: #{tpu_custom_call.1} parent=35 // pred_region
          %s361 = smul.u32 2, %s23
          %363 = vsyncadd %s354, 0
          %s364 = smul.addr %s22, 4
          %s365 = sadd.s32 %s361, %s364
          %s366 = smul.addr %s365, 8
          %s367 = scalar_lea.hbm %s4, %s366
          %s368 = sshll.u32 %s357, 4
          %s369 = int_to_ptr.vmem [resolvable:$true] %s368
          %s370 = sshll.u32 %s367, 4
          %s371 = int_to_ptr.hbm [resolvable:$true] %s370
          %376 = dma.vmem_to_hbm [thread:$0]  %s369, 512, %s371, %s354, 256, 256, 16
        $region40: #{tpu_custom_call.1} parent=35 // pred_fallthru
          _
      $region36: #{tpu_custom_call.1} parent=5 // pred_fallthru
        _
      %p377 = scmp.le.s32.totalorder 2, %s13
      // Predicated region
      $region41: #{tpu_custom_call.1} parent=5 // pred_check
        %p378 = pneg %p377
      $region42: #{tpu_custom_call.1} parent=5 // pred_check_branch
        %380 = sbr.rel (%p378) target = $region44
      $region43: #{tpu_custom_call.1} parent=5 // pred_region
        %s381 = ssub.s32 %s13, 2
        // Predicated region
        $region45: #{tpu_custom_call.1} parent=43 // pred_check
          %p382 = pneg %p147
        $region46: #{tpu_custom_call.1} parent=43 // pred_check_branch
          %384 = sbr.rel (%p382) target = $region48
        $region47: #{tpu_custom_call.1} parent=43 // pred_region
          %s385 = sand.u32 %s132, 1
          %s386 = scalar_lea.sflag [#allocation3], %s385
          %s387 = sand.u32 %s132, 1
          %s388 = smul.addr %s387, 32
          %s389 = scalar_lea.vmem [#allocation2], %s388
          %391 = dma.done %s386, 512
        $region48: #{tpu_custom_call.1} parent=43 // pred_fallthru
          _
      $region44: #{tpu_custom_call.1} parent=5 // pred_fallthru
        _
    $region6: #{tpu_custom_call.1} parent=1 // loop_footer
      %s17 = sadd.s32 1, %s13
    $region7: #{tpu_custom_call.1} parent=1 // loop_footer_branch
      %12 = sbr.rel target = $region3
    $region8: #{tpu_custom_call.1} parent=1 // loop_exit
      _
    %392 = vsyncpa [#allocation3], 1
    %s393 = scalar_lea.sflag [#allocation3], 1
    %394 = vsyncpa %s393, 1

</llo_original>
